<compile_context>
chip_gen: v7x
topology: tpu7x:2x2x1
jax: 0.10.0
libtpu: 0.0.40
codegen_flags: <defaults>
</compile_context>

<pallas_src>
import functools

import jax
import jax.numpy as jnp
from jax import lax
from jax.experimental import pallas as pl
from jax.experimental.pallas import tpu as pltpu


# ---------------------------------------------------------------------------
# In-kernel math
# ---------------------------------------------------------------------------

def _pow_gamma(base, gamma):
    g_int = int(gamma)
    if float(g_int) == float(gamma) and g_int >= 0:
        return lax.integer_pow(base, g_int)            # pure VPU multiplies
    return jnp.power(jnp.maximum(base, 1e-30), float(gamma))


def _terms_packed(x, t, *, want_pt):
    """CE (and pt) for the sublane-packed layout.

    x: (b_blk, C, 8, T) f32 -- the class axis indexes whole vregs, so everything
       below is plain elementwise VPU/EUP work on fully occupied (8, T) tiles.
    t: (b_blk, 1, 8, T) i32.
    Returns ce (and pt), each (b_blk, 1, 8, T) f32.
    """
    C = x.shape[1]
    m = x[:, 0:1]
    for c in range(1, C):
        m = jnp.maximum(m, x[:, c:c + 1])
    s = jnp.zeros_like(m)
    x_t = jnp.zeros_like(m)
    e_t = jnp.zeros_like(m) if want_pt else None
    for c in range(C):
        xc = x[:, c:c + 1]
        ec = jnp.exp(xc - m)
        s = s + ec
        hit = t == c
        x_t = jnp.where(hit, xc, x_t)
        if want_pt:
            e_t = jnp.where(hit, ec, e_t)
    ce = (m + jnp.log(s)) - x_t
    if not want_pt:
        return ce, None
    # pt = exp(-ce) == e[target] / sum(e): reuse the softmax numerator instead
    # of burning a second EUP exp per pixel.
    pt = e_t * pl.reciprocal(s, approx=False)
    return ce, pt


def _terms_sublane(x, t, *, want_pt):
    """CE (and pt) with classes on the sublane axis (fallback layout).

    x: (C, T) f32, t: (1, T) i32.  Used when S % 8 != 0 or C is large (sublanes
    are already well occupied in that case).
    """
    cls = lax.broadcasted_iota(jnp.int32, x.shape, 0)
    onehot = (cls == t).astype(jnp.float32)
    m = jnp.max(x, axis=0, keepdims=True)
    e = jnp.exp(x - m)
    s = jnp.sum(e, axis=0, keepdims=True)
    x_t = jnp.sum(onehot * x, axis=0, keepdims=True)
    ce = (m + jnp.log(s)) - x_t
    if not want_pt:
        return ce, None
    e_t = jnp.sum(onehot * e, axis=0, keepdims=True)
    pt = e_t * pl.reciprocal(s, approx=False)
    return ce, pt


def _load_and_mask(x_ref, t_ref, *, lane_valid, tile, n_inner, mask_tail):
    """Loads the block (upcasting after the VMEM load) and applies the tail
    mask only when the tile does not divide the lane extent (static)."""
    packed = len(x_ref.shape) == 4
    if packed:
        x = x_ref[...].astype(jnp.float32)             # (b_blk, C, 8, T)
        t = t_ref[...].astype(jnp.int32)               # (b_blk, 1, 8, T)
    else:
        x = x_ref[0].astype(jnp.float32)               # (C, T)
        t = t_ref[0].astype(jnp.int32)                 # (1, T)
    valid = None
    if mask_tail:
        oc, it = pl.program_id(1), pl.program_id(2)
        lane = lax.broadcasted_iota(jnp.int32, t.shape, t.ndim - 1)
        valid = (oc * n_inner + it) * tile + lane < lane_valid
        x = jnp.where(valid, x, 0.0)
        t = jnp.where(valid, t, 0)
    return packed, x, t, valid


def _sums_kernel(x_ref, t_ref, acc_ref, *, alpha, gamma, want_focal,
                 lane_valid, tile, n_inner, mask_tail):
    """Accumulates lane-wide partial sums of (focal loss | cross entropy)."""
    @pl.when(pl.program_id(2) == 0)
    def _():
        acc_ref[...] = jnp.zeros_like(acc_ref)

    packed, x, t, valid = _load_and_mask(
        x_ref, t_ref, lane_valid=lane_valid, tile=tile,
        n_inner=n_inner, mask_tail=mask_tail)
    terms = _terms_packed if packed else _terms_sublane
    ce, pt = terms(x, t, want_pt=want_focal)
    if want_focal:
        val = alpha * _pow_gamma(1.0 - pt, gamma) * ce
    else:
        val = ce
    if mask_tail:
        val = jnp.where(valid, val, 0.0)
    if packed:
        acc_ref[...] = acc_ref[...] + val
    else:
        acc_ref[0] = acc_ref[0] + val


def _elem_kernel(x_ref, t_ref, o_ref, *, alpha, gamma,
                 lane_valid, tile, n_inner, mask_tail):
    """Per-pixel focal loss map (logits=True, reduce=False path)."""
    packed, x, t, _ = _load_and_mask(
        x_ref, t_ref, lane_valid=lane_valid, tile=tile,
        n_inner=n_inner, mask_tail=mask_tail)
    terms = _terms_packed if packed else _terms_sublane
    ce, pt = terms(x, t, want_pt=True)
    f = alpha * _pow_gamma(1.0 - pt, gamma) * ce
    if packed:
        o_ref[...] = f.astype(o_ref.dtype)
    else:
        o_ref[0] = f.astype(o_ref.dtype)


# ---------------------------------------------------------------------------
# Host-side planning
# ---------------------------------------------------------------------------

def _pick_lane_tile(extent, want_lanes):
    """Largest lane tile <= want_lanes obeying the (*, 128) rule, preferring a
    divisor of `extent` so tail masking is statically elided."""
    if extent <= 128 or extent <= want_lanes:
        return extent                                  # full-extent block (always legal)
    want = max(128, (min(want_lanes, extent) // 128) * 128)
    best = 0
    for cand in range(want, 127, -128):
        if extent % cand == 0:
            best = cand
            break
    if best >= max(128, want // 2):
        return best                                    # divides: no tail mask
    return want                                        # non-divisor: kernel masks the tail


def _plan(B, C, S, x_item, t_item, *, target_block_bytes, max_pixels, small_c_max):
    packed = (S % 8 == 0) and (S >= 8) and (C <= small_c_max)
    group = 8 if packed else 1
    lane_extent = S // group

    want_pixels = int(max(1, min(max_pixels,
                                 target_block_bytes // max(1, C * x_item))))
    want_lanes = max(1, want_pixels // group)
    tile = _pick_lane_tile(lane_extent, want_lanes)
    n_tiles = -(-lane_extent // tile)
    mask_tail = (lane_extent % tile) != 0

    # Batch-row blocking: when a whole row still moves only a few KiB, pack
    # several batch rows per grid step so the ~0.35us step overhead amortizes.
    b_blk = 1
    if packed and n_tiles == 1:
        row_bytes = C * S * x_item + S * t_item
        want_b = max(1, target_block_bytes // max(1, row_bytes))
        for d in range(min(B, int(want_b)), 0, -1):
            if B % d == 0:
                b_blk = d
                break

    # Split the lane-tile axis into an outer 'parallel' chunk axis when batch
    # parallelism alone could leave a v7x TensorCore idle (B small / odd).
    if n_tiles % 2 == 0 and B < 4:
        n_outer, n_inner = 2, n_tiles // 2
    else:
        n_outer, n_inner = 1, n_tiles
    return packed, group, lane_extent, tile, b_blk, n_outer, n_inner, mask_tail


# ---------------------------------------------------------------------------
# Public wrapper
# ---------------------------------------------------------------------------

def focal_loss(inputs, targets, *, alpha=1.0, gamma=2.0, logits=False, reduce=True,
               target_block_bytes=2 * 1024 * 1024, max_pixels_per_step=1 << 18,
               small_c_max=32, extra_buffering=False):
    """inputs: [B, C, *spatial] logits; targets: [B, *spatial] integer class ids."""
    B, C = int(inputs.shape[0]), int(inputs.shape[1])
    spatial = tuple(int(d) for d in inputs.shape[2:])
    S = 1
    for d in spatial:
        S *= d
    N = B * S

    # Targets pass through in their caller dtype (int8/int16 cut read traffic
    # 4x/2x vs int32); the upcast to int32 happens in-VMEM.
    if not jnp.issubdtype(targets.dtype, jnp.integer):
        targets = targets.astype(jnp.int32)
    x_item = jnp.dtype(inputs.dtype).itemsize
    t_item = jnp.dtype(targets.dtype).itemsize

    (packed, group, lane_extent, tile, b_blk,
     n_outer, n_inner, mask_tail) = _plan(
        B, C, S, x_item, t_item, target_block_bytes=target_block_bytes,
        max_pixels=max_pixels_per_step, small_c_max=small_c_max)
    n_b = B // b_blk
    grid = (n_b, n_outer, n_inner)

    if packed:
        # Free views (keep NCHW memory order): pixels split as (8 groups, S/8).
        x_v = inputs.reshape(B, C, group, lane_extent)
        t_v = targets.reshape(B, 1, group, lane_extent)
        x_block = (b_blk, C, group, tile)
        t_block = (b_blk, 1, group, tile)
        o_block = (b_blk, 1, group, tile)
        x_map = lambda b, o, i: (b, 0, 0, o * n_inner + i)
        t_map = lambda b, o, i: (b, 0, 0, o * n_inner + i)
        a_map = lambda b, o, i: (b, o, 0, 0)
        e_map = lambda b, o, i: (b, 0, 0, o * n_inner + i)
        acc_shape = (B, n_outer, group, tile)
        elem_shape = (B, 1, group, lane_extent)
    else:
        x_v = inputs.reshape(B, C, S)
        t_v = targets.reshape(B, 1, S)
        x_block = (b_blk, C, tile)
        t_block = (b_blk, 1, tile)
        o_block = (b_blk, 1, tile)
        x_map = lambda b, o, i: (b, 0, o * n_inner + i)
        t_map = lambda b, o, i: (b, 0, o * n_inner + i)
        a_map = lambda b, o, i: (b, o, 0)
        e_map = lambda b, o, i: (b, 0, o * n_inner + i)
        acc_shape = (B, n_outer, tile)
        elem_shape = (B, 1, S)

    if extra_buffering:
        # Deeper prefetch for the big logits stream (only with VMEM headroom).
        x_spec = pl.BlockSpec(x_block, x_map, pipeline_mode=pl.Buffered(3))
    else:
        x_spec = pl.BlockSpec(x_block, x_map)
    in_specs = [x_spec, pl.BlockSpec(t_block, t_map)]

    # VMEM budget: double-buffered blocks, capped at 48 MiB so the same plan
    # also fits v7x's 64 MiB VMEM (scoped defaults: 16 MiB v5e, 32 MiB v6e/v7x).
    blk_bytes = (b_blk * C * group * tile * x_item
                 + b_blk * group * tile * t_item
                 + b_blk * group * tile * 4)
    vmem_limit = int(min(48 * 1024 * 1024, max(32 * 1024 * 1024, 4 * blk_bytes)))

    common = dict(lane_valid=lane_extent, tile=tile, n_inner=n_inner,
                  mask_tail=mask_tail)

    if logits and not reduce:
        kernel = functools.partial(_elem_kernel, alpha=float(alpha),
                                   gamma=float(gamma), **common)
        out = pl.pallas_call(
            kernel,
            out_shape=jax.ShapeDtypeStruct(elem_shape, inputs.dtype),
            grid_spec=pltpu.PrefetchScalarGridSpec(
                num_scalar_prefetch=0, grid=grid, in_specs=in_specs,
                out_specs=pl.BlockSpec(o_block, e_map)),
            compiler_params=pltpu.CompilerParams(
                dimension_semantics=("parallel", "parallel", "parallel"),
                vmem_limit_bytes=vmem_limit),
        )(x_v, t_v)
        return out.reshape((B,) + spatial)

    # Reduced paths: accumulate either the focal term (logits=True) or plain
    # cross entropy (logits=False) -- never both (mode specialization).
    kernel = functools.partial(_sums_kernel, alpha=float(alpha),
                               gamma=float(gamma), want_focal=bool(logits),
                               **common)
    part = pl.pallas_call(
        kernel,
        out_shape=jax.ShapeDtypeStruct(acc_shape, jnp.float32),
        grid_spec=pltpu.PrefetchScalarGridSpec(
            num_scalar_prefetch=0, grid=grid, in_specs=in_specs,
            out_specs=pl.BlockSpec(o_block, a_map)),
        compiler_params=pltpu.CompilerParams(
            dimension_semantics=("parallel", "parallel", "arbitrary"),
            vmem_limit_bytes=vmem_limit),
    )(x_v, t_v)

    if logits:
        return jnp.sum(part) / N               # mean of per-element focal loss
    # logits=False: F.cross_entropy(..., reduce=None) -> 'mean' reduction, so
    # the focal weighting applies to the scalar mean CE (PyTorch semantics);
    # torch.mean of a 0-d tensor is itself, so `reduce` does not change this.
    bce = jnp.sum(part) / N
    pt = jnp.exp(-bce)
    return alpha * (1.0 - pt) ** float(gamma) * bce


def _focal_ref(inputs, targets, alpha=1.0, gamma=2.0, logits=False, reduce=True):
    """Pure-JAX reference mirroring the PyTorch FocalLoss forward."""
    x = inputs.astype(jnp.float32)
    lse = jax.scipy.special.logsumexp(x, axis=1)
    l_t = jnp.take_along_axis(x, targets[:, None].astype(jnp.int32), axis=1)[:, 0]
    ce = lse - l_t
    bce = ce if logits else jnp.mean(ce)       # F.cross_entropy default: 'mean'
    pt = jnp.exp(-bce)
    f = alpha * (1.0 - pt) ** gamma * bce
    return jnp.mean(f) if reduce else f


if __name__ == "__main__":
    key = jax.random.PRNGKey(0)
    k1, k2 = jax.random.split(key)

    B, C, H, W = 2, 4, 16, 16
    logits_in = jax.random.normal(k1, (B, C, H, W), dtype=jnp.float32)
    targets = jax.random.randint(k2, (B, H, W), 0, C, dtype=jnp.int32)

    # Default module config: FocalLoss(alpha=1., gamma=2., logits=False, reduce=True)
    out_default = jax.block_until_ready(focal_loss(logits_in, targets))
    ref_default = _focal_ref(logits_in, targets)
    assert jnp.allclose(out_default, ref_default, rtol=1e-5, atol=1e-5), (
        out_default, ref_default)

    # logits=True: per-pixel CE + focal weighting, mean-reduced.
    out_l = jax.block_until_ready(focal_loss(logits_in, targets, logits=True))
    ref_l = _focal_ref(logits_in, targets, logits=True)
    assert jnp.allclose(out_l, ref_l, rtol=1e-5, atol=1e-5), (out_l, ref_l)

    # logits=True, reduce=False: per-pixel focal loss map (input dtype out).
    out_e = jax.block_until_ready(
        focal_loss(logits_in, targets, logits=True, reduce=False))
    ref_e = _focal_ref(logits_in, targets, logits=True, reduce=False)
    assert out_e.shape == targets.shape
    assert jnp.allclose(out_e, ref_e, rtol=1e-5, atol=1e-5)

    # bf16 logits (halves HBM reads; math still runs in f32 inside the kernel).
    out_b = jax.block_until_ready(
        focal_loss(logits_in.astype(jnp.bfloat16), targets, logits=True))
    ref_b = _focal_ref(logits_in.astype(jnp.bfloat16), targets, logits=True)
    assert jnp.allclose(out_b, ref_b, rtol=1e-3, atol=1e-3), (out_b, ref_b)

    # S % 8 != 0 exercises the classes-on-sublanes fallback layout.
    Hs, Ws = 5, 5
    logits_odd = jax.random.normal(k1, (B, C, Hs, Ws), dtype=jnp.float32)
    targets_odd = jax.random.randint(k2, (B, Hs, Ws), 0, C, dtype=jnp.int32)
    out_o = jax.block_until_ready(focal_loss(logits_odd, targets_odd))
    ref_o = _focal_ref(logits_odd, targets_odd)
    assert jnp.allclose(out_o, ref_o, rtol=1e-5, atol=1e-5), (out_o, ref_o)
    out_of = jax.block_until_ready(
        focal_loss(logits_odd, targets_odd, logits=True))
    ref_of = _focal_ref(logits_odd, targets_odd, logits=True)
    assert jnp.allclose(out_of, ref_of, rtol=1e-5, atol=1e-5), (out_of, ref_of)

    print("KERNEL_OK")
</pallas_src>

<mosaic_0001>
module attributes {stable_mosaic.version = 11 : i64} {
  func.func @_sums_kernel(%arg0: i32, %arg1: i32, %arg2: i32, %arg3: memref<2x4x8x32xf32, #tpu.memory_space<vmem>>, %arg4: memref<2x1x8x32xi32, #tpu.memory_space<vmem>>, %arg5: memref<2x1x8x32xf32, #tpu.memory_space<vmem>>) attributes {dimension_semantics = [#tpu.dimension_semantics<parallel>, #tpu.dimension_semantics<parallel>, #tpu.dimension_semantics<arbitrary>], iteration_bounds = array<i64: 1, 1, 1>, scalar_prefetch = 0 : i64, scratch_operands = 0 : i64, tpu.core_type = #tpu.core_type<tc>, window_params = [{transform_indices = @transform_0, window_bounds = array<i64: 2, 4, 8, 32>}, {transform_indices = @transform_1, window_bounds = array<i64: 2, 1, 8, 32>}, {transform_indices = @transform_2, window_bounds = array<i64: 2, 1, 8, 32>}]} {
    %c0_i32 = arith.constant 0 : i32
    %0 = arith.cmpi eq, %arg2, %c0_i32 : i32
    %1 = arith.extui %0 : i1 to i32
    %c0_i32_0 = arith.constant 0 : i32
    %2 = arith.cmpi ne, %1, %c0_i32_0 : i32
    scf.if %2 {
      %cst_18 = arith.constant 0.000000e+00 : f32
      %48 = vector.broadcast %cst_18 : f32 to vector<2x1x8x32xf32>
      %c0_19 = arith.constant 0 : index
      %c0_20 = arith.constant 0 : index
      %c0_21 = arith.constant 0 : index
      %c0_22 = arith.constant 0 : index
      %49 = vector.load %arg5[%c0_19, %c0_20, %c0_21, %c0_22] : memref<2x1x8x32xf32, #tpu.memory_space<vmem>>, vector<2x1x8x32xf32>
      tpu.vector_store %arg5[%c0_19, %c0_20, %c0_21, %c0_22], %48 {strides = array<i32>} : memref<2x1x8x32xf32, #tpu.memory_space<vmem>>, vector<2x1x8x32xf32>,
    } else {
    }
    %c0 = arith.constant 0 : index
    %c0_1 = arith.constant 0 : index
    %c0_2 = arith.constant 0 : index
    %c0_3 = arith.constant 0 : index
    %3 = vector.load %arg3[%c0, %c0_1, %c0_2, %c0_3] : memref<2x4x8x32xf32, #tpu.memory_space<vmem>>, vector<2x4x8x32xf32>
    %c0_4 = arith.constant 0 : index
    %c0_5 = arith.constant 0 : index
    %c0_6 = arith.constant 0 : index
    %c0_7 = arith.constant 0 : index
    %4 = vector.load %arg4[%c0_4, %c0_5, %c0_6, %c0_7] : memref<2x1x8x32xi32, #tpu.memory_space<vmem>>, vector<2x1x8x32xi32>
    %5 = vector.extract_strided_slice %3 {offsets = [0, 0, 0, 0], sizes = [2, 1, 8, 32], strides = [1, 1, 1, 1]} : vector<2x4x8x32xf32> to vector<2x1x8x32xf32>
    %6 = vector.extract_strided_slice %3 {offsets = [0, 1, 0, 0], sizes = [2, 1, 8, 32], strides = [1, 1, 1, 1]} : vector<2x4x8x32xf32> to vector<2x1x8x32xf32>
    %7 = arith.maximumf %5, %6 : vector<2x1x8x32xf32>
    %8 = vector.extract_strided_slice %3 {offsets = [0, 2, 0, 0], sizes = [2, 1, 8, 32], strides = [1, 1, 1, 1]} : vector<2x4x8x32xf32> to vector<2x1x8x32xf32>
    %9 = arith.maximumf %7, %8 : vector<2x1x8x32xf32>
    %10 = vector.extract_strided_slice %3 {offsets = [0, 3, 0, 0], sizes = [2, 1, 8, 32], strides = [1, 1, 1, 1]} : vector<2x4x8x32xf32> to vector<2x1x8x32xf32>
    %11 = arith.maximumf %9, %10 : vector<2x1x8x32xf32>
    %cst = arith.constant 0.000000e+00 : f32
    %12 = vector.broadcast %cst : f32 to vector<2x1x8x32xf32>
    %cst_8 = arith.constant 0.000000e+00 : f32
    %13 = vector.broadcast %cst_8 : f32 to vector<2x1x8x32xf32>
    %14 = vector.extract_strided_slice %3 {offsets = [0, 0, 0, 0], sizes = [2, 1, 8, 32], strides = [1, 1, 1, 1]} : vector<2x4x8x32xf32> to vector<2x1x8x32xf32>
    %15 = arith.subf %14, %11 : vector<2x1x8x32xf32>
    %16 = math.exp %15 : vector<2x1x8x32xf32>
    %17 = arith.addf %12, %16 : vector<2x1x8x32xf32>
    %c0_i32_9 = arith.constant 0 : i32
    %18 = vector.broadcast %c0_i32_9 : i32 to vector<2x1x8x32xi32>
    %19 = arith.cmpi eq, %4, %18 : vector<2x1x8x32xi32>
    %20 = arith.select %19, %14, %13 : vector<2x1x8x32xi1>, vector<2x1x8x32xf32>
    %21 = vector.extract_strided_slice %3 {offsets = [0, 1, 0, 0], sizes = [2, 1, 8, 32], strides = [1, 1, 1, 1]} : vector<2x4x8x32xf32> to vector<2x1x8x32xf32>
    %22 = arith.subf %21, %11 : vector<2x1x8x32xf32>
    %23 = math.exp %22 : vector<2x1x8x32xf32>
    %24 = arith.addf %17, %23 : vector<2x1x8x32xf32>
    %c1_i32 = arith.constant 1 : i32
    %25 = vector.broadcast %c1_i32 : i32 to vector<2x1x8x32xi32>
    %26 = arith.cmpi eq, %4, %25 : vector<2x1x8x32xi32>
    %27 = arith.select %26, %21, %20 : vector<2x1x8x32xi1>, vector<2x1x8x32xf32>
    %28 = vector.extract_strided_slice %3 {offsets = [0, 2, 0, 0], sizes = [2, 1, 8, 32], strides = [1, 1, 1, 1]} : vector<2x4x8x32xf32> to vector<2x1x8x32xf32>
    %29 = arith.subf %28, %11 : vector<2x1x8x32xf32>
    %30 = math.exp %29 : vector<2x1x8x32xf32>
    %31 = arith.addf %24, %30 : vector<2x1x8x32xf32>
    %c2_i32 = arith.constant 2 : i32
    %32 = vector.broadcast %c2_i32 : i32 to vector<2x1x8x32xi32>
    %33 = arith.cmpi eq, %4, %32 : vector<2x1x8x32xi32>
    %34 = arith.select %33, %28, %27 : vector<2x1x8x32xi1>, vector<2x1x8x32xf32>
    %35 = vector.extract_strided_slice %3 {offsets = [0, 3, 0, 0], sizes = [2, 1, 8, 32], strides = [1, 1, 1, 1]} : vector<2x4x8x32xf32> to vector<2x1x8x32xf32>
    %36 = arith.subf %35, %11 : vector<2x1x8x32xf32>
    %37 = math.exp %36 : vector<2x1x8x32xf32>
    %38 = arith.addf %31, %37 : vector<2x1x8x32xf32>
    %c3_i32 = arith.constant 3 : i32
    %39 = vector.broadcast %c3_i32 : i32 to vector<2x1x8x32xi32>
    %40 = arith.cmpi eq, %4, %39 : vector<2x1x8x32xi32>
    %41 = arith.select %40, %35, %34 : vector<2x1x8x32xi1>, vector<2x1x8x32xf32>
    %42 = math.log %38 : vector<2x1x8x32xf32>
    %43 = arith.addf %11, %42 : vector<2x1x8x32xf32>
    %44 = arith.subf %43, %41 : vector<2x1x8x32xf32>
    %c0_10 = arith.constant 0 : index
    %c0_11 = arith.constant 0 : index
    %c0_12 = arith.constant 0 : index
    %c0_13 = arith.constant 0 : index
    %45 = vector.load %arg5[%c0_10, %c0_11, %c0_12, %c0_13] : memref<2x1x8x32xf32, #tpu.memory_space<vmem>>, vector<2x1x8x32xf32>
    %46 = arith.addf %45, %44 : vector<2x1x8x32xf32>
    %c0_14 = arith.constant 0 : index
    %c0_15 = arith.constant 0 : index
    %c0_16 = arith.constant 0 : index
    %c0_17 = arith.constant 0 : index
    %47 = vector.load %arg5[%c0_14, %c0_15, %c0_16, %c0_17] : memref<2x1x8x32xf32, #tpu.memory_space<vmem>>, vector<2x1x8x32xf32>
    tpu.vector_store %arg5[%c0_14, %c0_15, %c0_16, %c0_17], %46 {strides = array<i32>} : memref<2x1x8x32xf32, #tpu.memory_space<vmem>>, vector<2x1x8x32xf32>,
    return
  }
  func.func @transform_0(%arg0: i32, %arg1: i32, %arg2: i32) -> (i32, i32, i32, i32) {
    %c1_i32 = arith.constant 1 : i32
    %0 = arith.muli %arg1, %c1_i32 : i32
    %1 = arith.addi %0, %arg2 : i32
    %c0_i32 = arith.constant 0 : i32
    %c0_i32_0 = arith.constant 0 : i32
    %c0_i32_1 = arith.constant 0 : i32
    return %arg0, %c0_i32, %c0_i32_0, %1 : i32, i32, i32, i32
  }
  func.func @transform_1(%arg0: i32, %arg1: i32, %arg2: i32) -> (i32, i32, i32, i32) {
    %c1_i32 = arith.constant 1 : i32
    %0 = arith.muli %arg1, %c1_i32 : i32
    %1 = arith.addi %0, %arg2 : i32
    %c0_i32 = arith.constant 0 : i32
    %c0_i32_0 = arith.constant 0 : i32
    %c0_i32_1 = arith.constant 0 : i32
    return %arg0, %c0_i32, %c0_i32_0, %1 : i32, i32, i32, i32
  }
  func.func @transform_2(%arg0: i32, %arg1: i32, %arg2: i32) -> (i32, i32, i32, i32) {
    %c0_i32 = arith.constant 0 : i32
    %c0_i32_0 = arith.constant 0 : i32
    %c0_i32_1 = arith.constant 0 : i32
    return %arg0, %arg1, %c0_i32, %c0_i32_0 : i32, i32, i32, i32
  }
}

</mosaic_0001>

<llo_original>
// kernel: tpu_custom_call.1
$region0: #{tpu_custom_call.1}
  #allocation0 [shape = 'u32[]', space=smem, size = 0x4, offset = 0x4, fixed_abs, tag = 'smem constant byte address 0x4 - core index']
  #allocation1 [shape = 'u32[144,128]{1,0:T(1,128)}', space=vmem, size = 0x12000, scoped, tag = 'internal scratch']
  %s0 = inlined_call_operand.hbm [shape: f32[2,4,8,32], index: 0, kind: input, shape index: {}]
  %s1 = inlined_call_operand.hbm [shape: s32[2,1,8,32], index: 1, kind: input, shape index: {}]
  %s2 = inlined_call_operand.hbm [shape: f32[2,1,8,32], index: 2, kind: output, shape index: {}]
  %s3 = sld [smem:[#allocation0]]
  $region30: #{tpu_custom_call.1} parent=0
    _
  %s5 = ssub.s32 1, %s3
  %s6 = scalar_select 0, %s5, %s3
  $region1: #{tpu_custom_call.1} parent=0
    #allocation2 [shape = 'u8[32768]{0}', space=vmem, size = 0x8000, scoped, tag = 'input window, operand 0, single buffered']
    #allocation3 [shape = 's32[1]{0}', space=sflag, size = 0x4, scoped, tag = 'scoped memory for tpu_custom_call.1']
    #allocation4 [shape = 's32[1]{0}', space=sflag, size = 0x4, scoped, tag = 'scoped memory for tpu_custom_call.1']
    #allocation5 [shape = 'u8[8192]{0}', space=vmem, size = 0x2000, scoped, tag = 'input window, operand 1, single buffered']
    #allocation6 [shape = 's32[1]{0}', space=sflag, size = 0x4, scoped, tag = 'scoped memory for tpu_custom_call.1']
    #allocation7 [shape = 'u8[8192]{0}', space=vmem, size = 0x2000, scoped, tag = 'output window, operand 0, single buffered']
    %7 = vsyncpa [#allocation3], 0
    %8 = vsyncpa [#allocation6], 0
    %9 = vsyncpa [#allocation4], 0
    // Predicated region
    $region2: #{tpu_custom_call.1} parent=1 // pred_check
      _
    $region3: #{tpu_custom_call.1} parent=1 // pred_check_branch
      %11 = sbr.rel (0) target = $region5
    $region4: #{tpu_custom_call.1} parent=1 // pred_region
      %s12 = sadd.s32 0, 0
      %s14 = ssub.s32 1024, 1024
      %15 = vsyncadd [#allocation3], %s14
      %s16 = smul.addr %s12, 128
      %s17 = scalar_lea.hbm %s0, %s16
      %s18 = sshll.u32 [#allocation2], 4
      %s19 = int_to_ptr.vmem [resolvable:$true] %s18
      %24 = dma.hbm_to_vmem [thread:$0]  %s17, 1024, %s19, [#allocation3], 128, 128, 8
    $region5: #{tpu_custom_call.1} parent=1 // pred_fallthru
      _
    // Predicated region
    $region6: #{tpu_custom_call.1} parent=1 // pred_check
      _
    $region7: #{tpu_custom_call.1} parent=1 // pred_check_branch
      %26 = sbr.rel (0) target = $region9
    $region8: #{tpu_custom_call.1} parent=1 // pred_region
      %s27 = sadd.s32 0, 0
      %s29 = ssub.s32 256, 256
      %30 = vsyncadd [#allocation6], %s29
      %s31 = smul.addr %s27, 128
      %s32 = scalar_lea.hbm %s1, %s31
      %s33 = sshll.u32 [#allocation5], 4
      %s34 = int_to_ptr.vmem [resolvable:$true] %s33
      %39 = dma.hbm_to_vmem [thread:$0]  %s32, 256, %s34, [#allocation6], 128, 128, 8
    $region9: #{tpu_custom_call.1} parent=1 // pred_fallthru
      _
    // Predicated region
    $region10: #{tpu_custom_call.1} parent=1 // pred_check
      _
    $region11: #{tpu_custom_call.1} parent=1 // pred_check_branch
      %41 = sbr.rel (0) target = $region13
    $region12: #{tpu_custom_call.1} parent=1 // pred_region
      %42 = dma.done [#allocation3], 1024
    $region13: #{tpu_custom_call.1} parent=1 // pred_fallthru
      _
    // Predicated region
    $region14: #{tpu_custom_call.1} parent=1 // pred_check
      _
    $region15: #{tpu_custom_call.1} parent=1 // pred_check_branch
      %44 = sbr.rel (0) target = $region17
    $region16: #{tpu_custom_call.1} parent=1 // pred_region
      %45 = dma.done [#allocation6], 256
    $region17: #{tpu_custom_call.1} parent=1 // pred_fallthru
      _
    %s46 = sadd.s32 0, 0
    %s47 = sadd.s32 0, 0
    %p48 = scmp.eq.s32.totalorder 0, 0
    // Predicated region
    $region18: #{tpu_custom_call.1} parent=1 // pred_check
      %p49 = pneg %p48
    $region19: #{tpu_custom_call.1} parent=1 // pred_check_branch
      %51 = sbr.rel (%p49) target = $region21
    $region20: #{tpu_custom_call.1} parent=1 // pred_region
      %vm52 = vcmask 261120
      %53 = vst.msk [vmem:[#allocation7] sm:$0xff] %vm52, 0.0
      %54 = vst.msk [vmem:[#allocation7 + $0x8] sm:$0xff] %vm52, 0.0
    $region21: #{tpu_custom_call.1} parent=1 // pred_fallthru
      _
    %v55 = vld [vmem:[#allocation2] sm:$0xff]
    %v56 = vld [vmem:[#allocation2 + $0x8] sm:$0xff]
    %v57 = vld [vmem:[#allocation2 + $0x10] sm:$0xff]
    %v58 = vld [vmem:[#allocation2 + $0x18] sm:$0xff]
    %v59 = vld [vmem:[#allocation2 + $0x20] sm:$0xff]
    %v60 = vld [vmem:[#allocation2 + $0x28] sm:$0xff]
    %v61 = vld [vmem:[#allocation2 + $0x30] sm:$0xff]
    %v62 = vld [vmem:[#allocation2 + $0x38] sm:$0xff]
    %v63 = vld [vmem:[#allocation5] sm:$0xff]
    %v64 = vld [vmem:[#allocation5 + $0x8] sm:$0xff]
    %v65 = vmax.f32 %v55, %v56
    %v66 = vmax.f32 %v59, %v60
    %v67 = vmax.f32 %v65, %v57
    %v68 = vmax.f32 %v66, %v61
    %v69 = vmax.f32 %v67, %v58
    %v70 = vmax.f32 %v68, %v62
    %v71 = vsub.f32 %v55, %v69
    %v72 = vsub.f32 %v59, %v70
    %v73 = vmul.f32 %v71, 1.442695
    %v74 = vpow.pop %v73
    %v75 = vmul.f32 %v72, 1.442695
    %v76 = vpow.pop %v75
    %v77 = vadd.f32 %v74, 0.0
    %v78 = vadd.f32 %v76, 0.0
    %vm79 = vcmp.eq.s32.totalorder %v63, 0
    %vm80 = vcmp.eq.s32.totalorder %v64, 0
    %v81 = vsel %vm79, %v55, 0.0
    %v82 = vsel %vm80, %v59, 0.0
    %v83 = vsub.f32 %v56, %v69
    %v84 = vsub.f32 %v60, %v70
    %v85 = vmul.f32 %v83, 1.442695
    %v86 = vpow.pop %v85
    %v87 = vmul.f32 %v84, 1.442695
    %v88 = vpow.pop %v87
    %v89 = vadd.f32 %v77, %v86
    %v90 = vadd.f32 %v78, %v88
    %vm91 = vcmp.eq.s32.totalorder %v63, 1
    %vm92 = vcmp.eq.s32.totalorder %v64, 1
    %v93 = vsel %vm91, %v56, %v81
    %v94 = vsel %vm92, %v60, %v82
    %v95 = vsub.f32 %v57, %v69
    %v96 = vsub.f32 %v61, %v70
    %v97 = vmul.f32 %v95, 1.442695
    %v98 = vpow.pop %v97
    %v99 = vmul.f32 %v96, 1.442695
    %v100 = vpow.pop %v99
    %v101 = vadd.f32 %v89, %v98
    %v102 = vadd.f32 %v90, %v100
    %vm103 = vcmp.eq.s32.totalorder %v63, 2
    %vm104 = vcmp.eq.s32.totalorder %v64, 2
    %v105 = vsel %vm103, %v57, %v93
    %v106 = vsel %vm104, %v61, %v94
    %v107 = vsub.f32 %v58, %v69
    %v108 = vsub.f32 %v62, %v70
    %v109 = vmul.f32 %v107, 1.442695
    %v110 = vpow.pop %v109
    %v111 = vmul.f32 %v108, 1.442695
    %v112 = vpow.pop %v111
    %v113 = vadd.f32 %v101, %v110
    %v114 = vadd.f32 %v102, %v112
    %vm115 = vcmp.eq.s32.totalorder %v63, 3
    %vm116 = vcmp.eq.s32.totalorder %v64, 3
    %v117 = vsel %vm115, %v58, %v105
    %v118 = vsel %vm116, %v62, %v106
    %v119 = vlog2.pop %v113
    %v120 = vmul.f32 %v119, 0.6931472
    %v121 = vlog2.pop %v114
    %v122 = vmul.f32 %v121, 0.6931472
    %v123 = vadd.f32 %v69, %v120
    %v124 = vadd.f32 %v70, %v122
    %v125 = vsub.f32 %v123, %v117
    %v126 = vsub.f32 %v124, %v118
    %v127 = vld [vmem:[#allocation7] sm:$0xff]
    %v128 = vld [vmem:[#allocation7 + $0x8] sm:$0xff]
    %v129 = vadd.f32 %v127, %v125
    %v130 = vadd.f32 %v128, %v126
    %vm131 = vcmask 261120
    %132 = vst.msk [vmem:[#allocation7] sm:$0xff] %vm131, %v129
    %133 = vst.msk [vmem:[#allocation7 + $0x8] sm:$0xff] %vm131, %v130
    // Predicated region
    $region22: #{tpu_custom_call.1} parent=1 // pred_check
      _
    $region23: #{tpu_custom_call.1} parent=1 // pred_check_branch
      %135 = sbr.rel (0) target = $region25
    $region24: #{tpu_custom_call.1} parent=1 // pred_region
      %s137 = ssub.s32 256, 256
      %138 = vsyncadd [#allocation4], %s137
      %s139 = sshll.u32 [#allocation7], 4
      %s140 = int_to_ptr.vmem [resolvable:$true] %s139
      %145 = dma.vmem_to_hbm [thread:$0]  %s140, 256, %s2, [#allocation4], 128, 128, 8
    $region25: #{tpu_custom_call.1} parent=1 // pred_fallthru
      _
    // Predicated region
    $region26: #{tpu_custom_call.1} parent=1 // pred_check
      _
    $region27: #{tpu_custom_call.1} parent=1 // pred_check_branch
      %147 = sbr.rel (0) target = $region29
    $region28: #{tpu_custom_call.1} parent=1 // pred_region
      %148 = dma.done [#allocation4], 256
    $region29: #{tpu_custom_call.1} parent=1 // pred_fallthru
      _
    %149 = vsyncpa [#allocation3], 1
    %150 = vsyncpa [#allocation6], 1
    %151 = vsyncpa [#allocation4], 1

</llo_original>
